<compile_context>
chip_gen: v7x
topology: tpu7x:2x2x1
jax: 0.10.0
libtpu: 0.0.40
codegen_flags: <defaults>
</compile_context>

<pallas_src>
import jax
import jax.numpy as jnp
from jax import lax
from jax.experimental import pallas as pl
from jax.experimental.pallas import tpu as pltpu


def _linear_bias_kernel(x_ref, w_ref, b_ref, o_ref):
    """One (b, n, k) grid step.

    x_ref: (1, HW, Cin)  grid-resident input slab (index map ignores n, k)
    w_ref: (tn, tk)      weight tile in native PyTorch (Cout, Cin) layout
    b_ref: (1, tn)       bias tile
    o_ref: (1, HW, tn)   f32 output block, accumulated in place across k
    """
    k = pl.program_id(2)
    tn, tk = w_ref.shape
    hw = o_ref.shape[1]

    @pl.when(k == 0)
    def _():
        # Fold the bias into the output-block init (no epilogue add needed).
        o_ref[0] = jnp.broadcast_to(b_ref[...].astype(o_ref.dtype), (hw, tn))

    # Slice the k-th Cin chunk out of the resident x slab (aligned lane slice).
    start = k * tk
    if tk % 128 == 0:
        start = pl.multiple_of(start, 128)
    x_chunk = x_ref[0, :, pl.ds(start, tk)]          # (HW, tk)

    # (HW, tk) . (tn, tk)^T over Cin -> (HW, tn): lane/N dim of the MXU result
    # and of the store is tn (multiple of 128) -> full MXU columns, unmasked
    # lane-dense vst.
    o_ref[0] += lax.dot_general(
        x_chunk,
        w_ref[...],
        dimension_numbers=(((1,), (1,)), ((), ())),
        preferred_element_type=jnp.float32,
    ).astype(o_ref.dtype)


def _pick_tile(dim, preferred):
    """Largest preferred tile that divides `dim`; else take the whole axis."""
    for t in preferred:
        if dim % t == 0:
            return t
    return dim


def linear_permute(x, weight, bias, *, tn=None, tk=None):
    """x: (B, H, W, Cin); weight: (Cout, Cin) [PyTorch layout]; bias: (Cout,).

    Returns (B, Cout, H, W), matching torch.permute(linear(x), [0, 3, 1, 2]).
    """
    B, H, W, Cin = x.shape
    Cout, Cin_w = weight.shape
    assert Cin_w == Cin, (weight.shape, Cin)
    HW = H * W

    if tn is None:
        # 2 n-tiles at Cout=1536 -> one per TensorCore on v7x megacore.
        tn = _pick_tile(Cout, (768, 512, 384, 256, 128))
    if tk is None:
        # Big K tiles -> few reduction steps (Cin=6144 -> 2 steps at tk=3072).
        tk = _pick_tile(Cin, (3072, 1536, 1024, 768, 512, 384, 256, 128))
    assert Cout % tn == 0 and Cin % tk == 0, (Cout, tn, Cin, tk)

    # Guard: the full-axis fallback must not blow VMEM (weight tile is
    # double-buffered by the pipeline).
    w_tile_bytes = tn * tk * weight.dtype.itemsize
    assert 2 * w_tile_bytes <= 28 * 1024 * 1024, (
        "weight tile too large for VMEM; pass smaller tn/tk explicitly",
        tn, tk,
    )

    x3 = x.reshape(B, HW, Cin)     # free reshape (row-major contiguous)
    b2 = bias.reshape(1, Cout)

    # TODO(synk): if B ever grows beyond 1, fold B*HW into the matmul M
    # dimension so the weight is streamed from HBM only once (this module has
    # B fixed at 1, so the (B, n, k) grid reads the weight exactly once).
    out3 = pl.pallas_call(
        _linear_bias_kernel,
        out_shape=jax.ShapeDtypeStruct((B, HW, Cout), x.dtype),
        grid_spec=pltpu.PrefetchScalarGridSpec(
            num_scalar_prefetch=0,
            grid=(B, Cout // tn, Cin // tk),
            in_specs=[
                # x: whole (HW, Cin) slab, resident across the (n, k) loops.
                pl.BlockSpec((1, HW, Cin), lambda b, n, k: (b, 0, 0)),
                # weight: (tn, tk) tile in native (Cout, Cin) layout.
                pl.BlockSpec((tn, tk), lambda b, n, k: (n, k)),
                # bias: (1, tn) tile.
                pl.BlockSpec((1, tn), lambda b, n, k: (0, n)),
            ],
            out_specs=pl.BlockSpec((1, HW, tn), lambda b, n, k: (b, 0, n)),
        ),
        compiler_params=pltpu.CompilerParams(
            # B and Cout axes are independent ("parallel" -> v7x megacore
            # splits the 2 Cout tiles across its TensorCores); the K reduction
            # is last and "arbitrary".
            dimension_semantics=("parallel", "parallel", "arbitrary"),
            # Cover the double-buffered weight tile (v5e's scoped default is
            # 16 MiB); 32 MiB also fits v7x's 64 MiB physical VMEM.
            vmem_limit_bytes=32 * 1024 * 1024,
        ),
    )(x3, weight, b2)

    # Kernel emits (B, HW, Cout) with lane-dense stores; the NCHW permute is a
    # tiny (~0.3 MB at the real shapes) XLA transpose.
    return jnp.transpose(out3.reshape(B, H, W, Cout), (0, 3, 1, 2))


if __name__ == "__main__":
    # Small shapes consistent with the module (real module: 1x7x7, 6144 -> 1536).
    B, Hs, Ws, Cin, Cout = 1, 7, 7, 1024, 512

    key = jax.random.PRNGKey(0)
    kx, kw, kb = jax.random.split(key, 3)

    x = jax.random.normal(kx, (B, Hs, Ws, Cin), dtype=jnp.float32)
    # Deterministic Linear params (PyTorch layout: weight (Cout, Cin), bias (Cout,)).
    weight = jax.random.normal(kw, (Cout, Cin), dtype=jnp.float32) * (Cin ** -0.5)
    bias = jax.random.normal(kb, (Cout,), dtype=jnp.float32) * 0.01

    # Explicit small tiles so the test exercises both the parallel Cout axis
    # (2 n-tiles) and the K accumulation (2 steps).  At the real 6144->1536
    # size the auto-picked tiles are tn=768, tk=3072 (2 n-tiles x 2 K steps).
    out = linear_permute(x, weight, bias, tn=256, tk=512)
    out = jax.block_until_ready(out)

    # Reference check (plain JAX).
    ref = jnp.einsum("bhwc,oc->bhwo", x, weight) + bias
    ref = jnp.transpose(ref, (0, 3, 1, 2))

    assert out.shape == (B, Cout, Hs, Ws), out.shape
    assert jnp.allclose(out, ref, atol=1e-3, rtol=1e-3), float(
        jnp.max(jnp.abs(out - ref))
    )

    print("KERNEL_OK")
</pallas_src>

<mosaic_0001>
module attributes {stable_mosaic.version = 11 : i64} {
  func.func @_linear_bias_kernel(%arg0: i32, %arg1: i32, %arg2: i32, %arg3: memref<1x49x1024xf32, #tpu.memory_space<vmem>>, %arg4: memref<256x512xf32, #tpu.memory_space<vmem>>, %arg5: memref<1x256xf32, #tpu.memory_space<vmem>>, %arg6: memref<1x49x256xf32, #tpu.memory_space<vmem>>) attributes {dimension_semantics = [#tpu.dimension_semantics<parallel>, #tpu.dimension_semantics<parallel>, #tpu.dimension_semantics<arbitrary>], iteration_bounds = array<i64: 1, 2, 2>, scalar_prefetch = 0 : i64, scratch_operands = 0 : i64, tpu.core_type = #tpu.core_type<tc>, window_params = [{transform_indices = @transform_0, window_bounds = array<i64: 1, 49, 1024>}, {transform_indices = @transform_1, window_bounds = array<i64: 256, 512>}, {transform_indices = @transform_2, window_bounds = array<i64: 1, 256>}, {transform_indices = @transform_3, window_bounds = array<i64: 1, 49, 256>}]} {
    %c0_i32 = arith.constant 0 : i32
    %0 = arith.cmpi eq, %arg2, %c0_i32 : i32
    %1 = arith.extui %0 : i1 to i32
    %c0_i32_0 = arith.constant 0 : i32
    %2 = arith.cmpi ne, %1, %c0_i32_0 : i32
    scf.if %2 {
      %c0_10 = arith.constant 0 : index
      %c0_11 = arith.constant 0 : index
      %16 = vector.load %arg5[%c0_10, %c0_11] : memref<1x256xf32, #tpu.memory_space<vmem>>, vector<1x256xf32>
      %17 = vector.shape_cast %16 : vector<1x256xf32> to vector<1x256xf32>
      %18 = vector.broadcast %17 : vector<1x256xf32> to vector<49x256xf32>
      %c0_12 = arith.constant 0 : index
      %c0_13 = arith.constant 0 : index
      %c0_14 = arith.constant 0 : index
      %19 = vector.load %arg6[%c0_12, %c0_13, %c0_14] : memref<1x49x256xf32, #tpu.memory_space<vmem>>, vector<1x49x256xf32>
      %20 = vector.shape_cast %19 : vector<1x49x256xf32> to vector<49x256xf32>
      %21 = vector.shape_cast %18 : vector<49x256xf32> to vector<1x49x256xf32>
      tpu.vector_store %arg6[%c0_12, %c0_13, %c0_14], %21 {strides = array<i32>} : memref<1x49x256xf32, #tpu.memory_space<vmem>>, vector<1x49x256xf32>,
    } else {
    }
    %c512_i32 = arith.constant 512 : i32
    %3 = arith.muli %arg2, %c512_i32 : i32
    %4 = tpu.assume_multiple %3, 128 : i32
    %c0 = arith.constant 0 : index
    %c0_1 = arith.constant 0 : index
    %5 = arith.index_cast %4 : i32 to index
    %6 = vector.load %arg3[%c0, %c0_1, %5] : memref<1x49x1024xf32, #tpu.memory_space<vmem>>, vector<1x49x512xf32>
    %7 = vector.shape_cast %6 : vector<1x49x512xf32> to vector<49x512xf32>
    %c0_2 = arith.constant 0 : index
    %c0_3 = arith.constant 0 : index
    %c0_4 = arith.constant 0 : index
    %8 = vector.load %arg6[%c0_2, %c0_3, %c0_4] : memref<1x49x256xf32, #tpu.memory_space<vmem>>, vector<1x49x256xf32>
    %9 = vector.shape_cast %8 : vector<1x49x256xf32> to vector<49x256xf32>
    %c0_5 = arith.constant 0 : index
    %c0_6 = arith.constant 0 : index
    %10 = vector.load %arg4[%c0_5, %c0_6] : memref<256x512xf32, #tpu.memory_space<vmem>>, vector<256x512xf32>
    %cst = arith.constant dense<0.000000e+00> : vector<49x256xf32>
    %11 = tpu.matmul %7, %10, %cst {dimension_numbers = #tpu.dot_dimension_numbers<[1], [1], [0], [0], [0, 0, 1, 0], [], []>} : vector<49x512xf32>, vector<256x512xf32>, vector<49x256xf32> -> vector<49x256xf32>
    %12 = arith.addf %9, %11 : vector<49x256xf32>
    %c0_7 = arith.constant 0 : index
    %c0_8 = arith.constant 0 : index
    %c0_9 = arith.constant 0 : index
    %13 = vector.load %arg6[%c0_7, %c0_8, %c0_9] : memref<1x49x256xf32, #tpu.memory_space<vmem>>, vector<1x49x256xf32>
    %14 = vector.shape_cast %13 : vector<1x49x256xf32> to vector<49x256xf32>
    %15 = vector.shape_cast %12 : vector<49x256xf32> to vector<1x49x256xf32>
    tpu.vector_store %arg6[%c0_7, %c0_8, %c0_9], %15 {strides = array<i32>} : memref<1x49x256xf32, #tpu.memory_space<vmem>>, vector<1x49x256xf32>,
    return
  }
  func.func @transform_0(%arg0: i32, %arg1: i32, %arg2: i32) -> (i32, i32, i32) {
    %c0_i32 = arith.constant 0 : i32
    %c0_i32_0 = arith.constant 0 : i32
    %c0_i32_1 = arith.constant 0 : i32
    return %arg0, %c0_i32, %c0_i32_0 : i32, i32, i32
  }
  func.func @transform_1(%arg0: i32, %arg1: i32, %arg2: i32) -> (i32, i32) {
    %c0_i32 = arith.constant 0 : i32
    return %arg1, %arg2 : i32, i32
  }
  func.func @transform_2(%arg0: i32, %arg1: i32, %arg2: i32) -> (i32, i32) {
    %c0_i32 = arith.constant 0 : i32
    %c0_i32_0 = arith.constant 0 : i32
    return %c0_i32, %arg1 : i32, i32
  }
  func.func @transform_3(%arg0: i32, %arg1: i32, %arg2: i32) -> (i32, i32, i32) {
    %c0_i32 = arith.constant 0 : i32
    %c0_i32_0 = arith.constant 0 : i32
    return %arg0, %c0_i32, %arg1 : i32, i32, i32
  }
}

</mosaic_0001>

<llo_original>
// kernel: tpu_custom_call.1
$region0: #{tpu_custom_call.1}
  #allocation0 [shape = 'u32[]', space=smem, size = 0x4, offset = 0x4, fixed_abs, tag = 'smem constant byte address 0x4 - core index']
  #allocation1 [shape = 'u32[144,128]{1,0:T(1,128)}', space=vmem, size = 0x12000, scoped, tag = 'internal scratch']
  %s0 = inlined_call_operand.vmem [shape: f32[1,49,1024], index: 0, kind: input, shape index: {}]
  %s1 = inlined_call_operand.hbm [shape: f32[512,1024], index: 1, kind: input, shape index: {}]
  %s2 = inlined_call_operand.hbm [shape: f32[1,512], index: 2, kind: input, shape index: {}]
  %s3 = inlined_call_operand.vmem [shape: f32[1,49,512], index: 3, kind: output, shape index: {}]
  %s4 = sld [smem:[#allocation0]]
  $region76: #{tpu_custom_call.1} parent=0
    _
  %s6 = ssub.s32 1, %s4
  %s7 = scalar_select 0, %s6, %s4
  $region1: #{tpu_custom_call.1} parent=0
    #allocation2 [shape = 'u8[1048576]{0}', space=vmem, size = 0x100000, scoped, tag = 'input window, operand 1']
    #allocation3 [shape = 's32[2]{0}', space=sflag, size = 0x8, scoped, tag = 'scoped memory for tpu_custom_call.1']
    #allocation4 [shape = 'u8[2048]{0}', space=vmem, size = 0x800, scoped, tag = 'input window, operand 2']
    #allocation5 [shape = 's32[2]{0}', space=sflag, size = 0x8, scoped, tag = 'scoped memory for tpu_custom_call.1']
    #allocation6 [shape = 'u8[114688]{0}', space=vmem, size = 0x1c000, scoped, tag = 'output window, operand 0']
    %8 = vsyncpa [#allocation3], 0
    %s9 = scalar_lea.sflag [#allocation3], 1
    %10 = vsyncpa %s9, 0
    %11 = vsyncpa [#allocation5], 0
    %s12 = scalar_lea.sflag [#allocation5], 1
    %13 = vsyncpa %s12, 0
    loop: start=0, step=1, limit=6
    $region2: #{tpu_custom_call.1} parent=1 // loop_pre_header
      _
    $region3: #{tpu_custom_call.1} parent=1 // loop_header
      %s15 = sphi 0, %s19
      %p16 = scmp.ge.s32.totalorder %s15, 6
      %s22 = sphi 0, %s41
      %s23 = sphi 0, %s37
      %s24 = sphi 0, %s33
      %s25 = sphi 0, %s22
      %s26 = sphi 0, %s23
      %s27 = sphi 0, %s24
      %s28 = sphi 0, %s25
      %s29 = sphi 0, %s26
      %s30 = sphi 0, %s27
      %s44 = sphi 0, %s46
      %s47 = sphi 0, %s44
      %s48 = sphi 0, %s47
      %s64 = sphi 0, %s48
      %s72 = sphi 0, %s74
      %s75 = sphi 0, %s72
      %s76 = sphi 0, %s75
      %s92 = sphi 0, %s76
      %s98 = sphi 0, %s100
      %s101 = sphi 0, %s98
      %s102 = sphi 0, %s101
      %s118 = sphi 0, %s102
      %s126 = sphi 0, %s128
      %s129 = sphi 0, %s126
      %s130 = sphi 0, %s129
      %s146 = sphi 0, %s130
    $region4: #{tpu_custom_call.1} parent=1 // loop_header_branch
      %18 = sbr.rel (%p16) target = $region8
    $region5: #{tpu_custom_call.1} parent=1 // loop_body
      %s20 = ssub.s32 %s15, 1
      %s21 = ssub.s32 %s15, 2
      %s31 = sadd.s32 1, %s24
      %p32 = scmp.ge.s32.totalorder %s31, 2
      %s33 = scalar_select %p32, 0, %s31
      %s34 = sadd.s32 1, %s23
      %s35 = scalar_select %p32, %s34, %s23
      %p36 = scmp.ge.s32.totalorder %s35, 2
      %s37 = scalar_select %p36, 0, %s35
      %s38 = sadd.s32 1, %s22
      %s39 = scalar_select %p36, %s38, %s22
      %p40 = scmp.ge.s32.totalorder %s39, 1
      %s41 = scalar_select %p40, 0, %s39
      %s42 = ssub.s32 %s22, %s41
      %p43 = scmp.eq.s32.totalorder %s42, 0
      %s45 = sadd.s32 %s44, 1
      %s46 = scalar_select %p43, %s44, %s45
      %p49 = pneg %p43
      %p50 = scmp.eq.s32.totalorder %s15, 3
      %p51 = por %p49, %p50
      %p52 = scmp.ne.s32.totalorder %s44, %s47
      %p53 = scmp.eq.s32.totalorder %s15, 0
      %p54 = por %p52, %p53
      %p55 = scmp.ne.s32.totalorder %s44, %s47
      %p56 = scmp.eq.s32.totalorder %s20, 3
      %p57 = por %p55, %p56
      %p58 = scmp.ne.s32.totalorder %s47, %s48
      %p59 = scmp.eq.s32.totalorder %s20, 0
      %p60 = por %p58, %p59
      %p61 = scmp.ne.s32.totalorder %s47, %s48
      %p62 = scmp.eq.s32.totalorder %s21, 3
      %p63 = por %p61, %p62
      %p65 = scmp.ne.s32.totalorder %s48, %s64
      %p66 = scmp.eq.s32.totalorder %s21, 0
      %p67 = por %p65, %p66
      %s68 = ssub.s32 %s23, %s37
      %s69 = ssub.s32 %s24, %s33
      %s70 = sor.u32 %s68, %s69
      %p71 = scmp.eq.s32.totalorder %s70, 0
      %s73 = sadd.s32 %s72, 1
      %s74 = scalar_select %p71, %s72, %s73
      %p77 = pneg %p71
      %p78 = scmp.eq.s32.totalorder %s15, 3
      %p79 = por %p77, %p78
      %p80 = scmp.ne.s32.totalorder %s72, %s75
      %p81 = scmp.eq.s32.totalorder %s15, 0
      %p82 = por %p80, %p81
      %p83 = scmp.ne.s32.totalorder %s72, %s75
      %p84 = scmp.eq.s32.totalorder %s20, 3
      %p85 = por %p83, %p84
      %p86 = scmp.ne.s32.totalorder %s75, %s76
      %p87 = scmp.eq.s32.totalorder %s20, 0
      %p88 = por %p86, %p87
      %p89 = scmp.ne.s32.totalorder %s75, %s76
      %p90 = scmp.eq.s32.totalorder %s21, 3
      %p91 = por %p89, %p90
      %p93 = scmp.ne.s32.totalorder %s76, %s92
      %p94 = scmp.eq.s32.totalorder %s21, 0
      %p95 = por %p93, %p94
      %s96 = ssub.s32 %s23, %s37
      %p97 = scmp.eq.s32.totalorder %s96, 0
      %s99 = sadd.s32 %s98, 1
      %s100 = scalar_select %p97, %s98, %s99
      %p103 = pneg %p97
      %p104 = scmp.eq.s32.totalorder %s15, 3
      %p105 = por %p103, %p104
      %p106 = scmp.ne.s32.totalorder %s98, %s101
      %p107 = scmp.eq.s32.totalorder %s15, 0
      %p108 = por %p106, %p107
      %p109 = scmp.ne.s32.totalorder %s98, %s101
      %p110 = scmp.eq.s32.totalorder %s20, 3
      %p111 = por %p109, %p110
      %p112 = scmp.ne.s32.totalorder %s101, %s102
      %p113 = scmp.eq.s32.totalorder %s20, 0
      %p114 = por %p112, %p113
      %p115 = scmp.ne.s32.totalorder %s101, %s102
      %p116 = scmp.eq.s32.totalorder %s21, 3
      %p117 = por %p115, %p116
      %p119 = scmp.ne.s32.totalorder %s102, %s118
      %p120 = scmp.eq.s32.totalorder %s21, 0
      %p121 = por %p119, %p120
      %s122 = ssub.s32 %s22, %s41
      %s123 = ssub.s32 %s23, %s37
      %s124 = sor.u32 %s122, %s123
      %p125 = scmp.eq.s32.totalorder %s124, 0
      %s127 = sadd.s32 %s126, 1
      %s128 = scalar_select %p125, %s126, %s127
      %p131 = pneg %p125
      %p132 = scmp.eq.s32.totalorder %s15, 3
      %p133 = por %p131, %p132
      %p134 = scmp.ne.s32.totalorder %s126, %s129
      %p135 = scmp.eq.s32.totalorder %s15, 0
      %p136 = por %p134, %p135
      %p137 = scmp.ne.s32.totalorder %s126, %s129
      %p138 = scmp.eq.s32.totalorder %s20, 3
      %p139 = por %p137, %p138
      %p140 = scmp.ne.s32.totalorder %s129, %s130
      %p141 = scmp.eq.s32.totalorder %s20, 0
      %p142 = por %p140, %p141
      %p143 = scmp.ne.s32.totalorder %s129, %s130
      %p144 = scmp.eq.s32.totalorder %s21, 3
      %p145 = por %p143, %p144
      %p147 = scmp.ne.s32.totalorder %s130, %s146
      %p148 = scmp.eq.s32.totalorder %s21, 0
      %p149 = por %p147, %p148
      %p150 = scmp.le.s32.totalorder 1, %s15
      %p151 = scmp.lt.s32.totalorder %s15, 5
      %p152 = pnand %p150, %p151
      %p153 = pneg %p152
      // Predicated region
      $region9: #{tpu_custom_call.1} parent=5 // pred_check
        _
      $region10: #{tpu_custom_call.1} parent=5 // pred_check_branch
        %155 = sbr.rel (%p152) target = $region12
      $region11: #{tpu_custom_call.1} parent=5 // pred_region
        %s156 = ssub.s32 %s15, 1
        // Predicated region
        $region13: #{tpu_custom_call.1} parent=11 // pred_check
          %p157 = pneg %p60
        $region14: #{tpu_custom_call.1} parent=11 // pred_check_branch
          %159 = sbr.rel (%p157) target = $region16
        $region15: #{tpu_custom_call.1} parent=11 // pred_region
          %p160 = scmp.lt.s32.totalorder %s25, 0
          %s161 = scalar_select %p160, %s25, 0
          %s162 = smul.addr %s161, 56
          %s163 = smul.addr %s162, 8
          %s164 = scalar_lea.vmem %s0, %s163
        $region16: #{tpu_custom_call.1} parent=11 // pred_fallthru
          _
      $region12: #{tpu_custom_call.1} parent=5 // pred_fallthru
        _
      %p165 = scmp.lt.s32.totalorder %s15, 4
      // Predicated region
      $region17: #{tpu_custom_call.1} parent=5 // pred_check
        %p166 = pneg %p165
      $region18: #{tpu_custom_call.1} parent=5 // pred_check_branch
        %168 = sbr.rel (%p166) target = $region20
      $region19: #{tpu_custom_call.1} parent=5 // pred_region
        // Predicated region
        $region21: #{tpu_custom_call.1} parent=19 // pred_check
          %p169 = pneg %p82
        $region22: #{tpu_custom_call.1} parent=19 // pred_check_branch
          %171 = sbr.rel (%p169) target = $region24
        $region23: #{tpu_custom_call.1} parent=19 // pred_region
          %s172 = sand.u32 %s72, 1
          %s173 = scalar_lea.sflag [#allocation3], %s172
          %s174 = sand.u32 %s72, 1
          %s175 = smul.addr %s174, 1024
          %s176 = scalar_lea.vmem [#allocation2], %s175
          %s177 = smul.u32 32, %s23
          %s178 = smul.u32 4, %s24
          %s180 = ssub.s32 16384, 16384
          %181 = vsyncadd %s173, %s180
          %s182 = smul.addr %s177, 8
          %s183 = sadd.s32 %s178, %s182
          %s184 = smul.addr %s183, 128
          %s185 = scalar_lea.hbm %s1, %s184
          %s186 = sshll.u32 %s176, 4
          %s187 = int_to_ptr.vmem [resolvable:$true] %s186
          %192 = dma.hbm_to_vmem [thread:$0]  %s185, 16384, %s187, %s173, 1024, 512, 32
        $region24: #{tpu_custom_call.1} parent=19 // pred_fallthru
          _
        // Predicated region
        $region25: #{tpu_custom_call.1} parent=19 // pred_check
          %p193 = pneg %p108
        $region26: #{tpu_custom_call.1} parent=19 // pred_check_branch
          %195 = sbr.rel (%p193) target = $region28
        $region27: #{tpu_custom_call.1} parent=19 // pred_region
          %s196 = sand.u32 %s98, 1
          %s197 = scalar_lea.sflag [#allocation5], %s196
          %s198 = sand.u32 %s98, 1
          %s199 = smul.addr %s198, 2
          %s200 = scalar_lea.vmem [#allocation4], %s199
          %s201 = smul.u32 2, %s23
          %s203 = ssub.s32 32, 32
          %204 = vsyncadd %s197, %s203
          %s205 = smul.addr %s201, 16
          %s206 = scalar_lea.hbm %s2, %s205
          %s208 = sshll.u32 %s200, 4
          %s209 = int_to_ptr.vmem [resolvable:$true] %s208
          %211 = dma.hbm_to_vmem [thread:$0]  %s206, 32, %s209, %s197
        $region28: #{tpu_custom_call.1} parent=19 // pred_fallthru
          _
      $region20: #{tpu_custom_call.1} parent=5 // pred_fallthru
        _
      %p212 = scmp.le.s32.totalorder 1, %s15
      %p213 = scmp.lt.s32.totalorder %s15, 5
      %p214 = pnand %p212, %p213
      %p215 = pneg %p214
      // Predicated region
      $region29: #{tpu_custom_call.1} parent=5 // pred_check
        _
      $region30: #{tpu_custom_call.1} parent=5 // pred_check_branch
        %217 = sbr.rel (%p214) target = $region32
      $region31: #{tpu_custom_call.1} parent=5 // pred_region
        %s218 = ssub.s32 %s15, 1
        %s219 = sand.u32 %s75, 1
        %s220 = scalar_lea.sflag [#allocation3], %s219
        %s221 = sand.u32 %s75, 1
        %s222 = smul.addr %s221, 1024
        %s223 = scalar_lea.vmem [#allocation2], %s222
        // Predicated region
        $region33: #{tpu_custom_call.1} parent=31 // pred_check
          %p224 = pneg %p88
        $region34: #{tpu_custom_call.1} parent=31 // pred_check_branch
          %226 = sbr.rel (%p224) target = $region36
        $region35: #{tpu_custom_call.1} parent=31 // pred_region
          %227 = dma.done %s220, 16384
        $region36: #{tpu_custom_call.1} parent=31 // pred_fallthru
          _
        %s228 = sand.u32 %s101, 1
        %s229 = scalar_lea.sflag [#allocation5], %s228
        %s230 = sand.u32 %s101, 1
        %s231 = smul.addr %s230, 2
        %s232 = scalar_lea.vmem [#allocation4], %s231
        // Predicated region
        $region37: #{tpu_custom_call.1} parent=31 // pred_check
          %p233 = pneg %p114
        $region38: #{tpu_custom_call.1} parent=31 // pred_check_branch
          %235 = sbr.rel (%p233) target = $region40
        $region39: #{tpu_custom_call.1} parent=31 // pred_region
          %236 = dma.done %s229, 32
        $region40: #{tpu_custom_call.1} parent=31 // pred_fallthru
          _
        %p237 = scmp.lt.s32.totalorder %s25, 0
        %s238 = scalar_select %p237, %s25, 0
        %s239 = smul.addr %s238, 56
        %s240 = smul.addr %s239, 8
        %s241 = scalar_lea.vmem %s0, %s240
        %p242 = pneg %p60
        %p243 = pneg %p57
        %s244 = sand.u32 %s75, 1
        %s245 = scalar_lea.sflag [#allocation3], %s244
        %s246 = sand.u32 %s75, 1
        %s247 = smul.addr %s246, 1024
        %s248 = scalar_lea.vmem [#allocation2], %s247
        %p249 = pneg %p88
        %p250 = pneg %p85
        %s251 = sand.u32 %s101, 1
        %s252 = scalar_lea.sflag [#allocation5], %s251
        %s253 = sand.u32 %s101, 1
        %s254 = smul.addr %s253, 2
        %s255 = scalar_lea.vmem [#allocation4], %s254
        %p256 = pneg %p114
        %p257 = pneg %p111
        %p258 = pneg %p142
        %p259 = pneg %p139
        %s260 = sand.u32 %s129, 1
        %s261 = sand.u32 %s129, 1
        %s262 = smul.addr %s261, 112
        %s263 = scalar_lea.vmem [#allocation6], %s262
        %p264 = scmp.lt.s32.totalorder %s25, 0
        %s265 = scalar_select %p264, %s25, 0
        %s266 = smul.addr %s265, 56
        %s267 = smul.addr %s266, 8
        %s268 = scalar_lea.vmem %s0, %s267
        %s269 = smul.u32 32, %s26
        %s270 = smul.u32 4, %s27
        %s271 = smul.u32 2, %s26
        %s272 = smul.u32 2, %s26
        %p273 = scmp.eq.s32.totalorder %s27, 0
        // Predicated region
        $region41: #{tpu_custom_call.1} parent=31 // pred_check
          %p274 = pneg %p273
        $region42: #{tpu_custom_call.1} parent=31 // pred_check_branch
          %276 = sbr.rel (%p274) target = $region44
        $region43: #{tpu_custom_call.1} parent=31 // pred_region
          %v277 = vld [vmem:[%s232] sm:$0x3]
          %v279 = vlaneseq
          %v280 = vshrl.u32 %v279, 7
          %v281 = vsub.s32 0, %v280
          %v282 = vrot.slane %v277, %v281
          %v283 = vlaneseq
          %v284 = vshrl.u32 %v283, 7
          %v285 = vsub.s32 1, %v284
          %v286 = vrot.slane %v277, %v285
          %289 = vst [vmem:[%s263] sm:$0xff] %v282
          %290 = vst [vmem:[%s263 + $0x8] sm:$0xff] %v286
          %291 = vst [vmem:[%s263 + $0x10] sm:$0xff] %v282
          %292 = vst [vmem:[%s263 + $0x18] sm:$0xff] %v286
          %293 = vst [vmem:[%s263 + $0x20] sm:$0xff] %v282
          %294 = vst [vmem:[%s263 + $0x28] sm:$0xff] %v286
          %295 = vst [vmem:[%s263 + $0x30] sm:$0xff] %v282
          %296 = vst [vmem:[%s263 + $0x38] sm:$0xff] %v286
          %297 = vst [vmem:[%s263 + $0x40] sm:$0xff] %v282
          %298 = vst [vmem:[%s263 + $0x48] sm:$0xff] %v286
          %299 = vst [vmem:[%s263 + $0x50] sm:$0xff] %v282
          %300 = vst [vmem:[%s263 + $0x58] sm:$0xff] %v286
          %301 = vst [vmem:[%s263 + $0x60] sm:$0x1] %v282
          %302 = vst [vmem:[%s263 + $0x68] sm:$0x1] %v286
        $region44: #{tpu_custom_call.1} parent=31 // pred_fallthru
          _
        %s303 = smul.u32 %s27, 512
        %s304 = sshra.s32 %s303, 7
        %s305 = sand.u32 %s303, 127
        %s306 = smul.addr %s304, 8
        %s307 = scalar_lea.vmem %s268, %s306
        %v308 = vld [vmem:[%s307] sm:$0xff]
        %v309 = vld [vmem:[%s307 + $0x8] sm:$0xff]
        %v310 = vld [vmem:[%s307 + $0x10] sm:$0xff]
        %v311 = vld [vmem:[%s307 + $0x18] sm:$0xff]
        %v312 = vld [vmem:[%s307 + $0x40] sm:$0xff]
        %v313 = vld [vmem:[%s307 + $0x48] sm:$0xff]
        %v314 = vld [vmem:[%s307 + $0x50] sm:$0xff]
        %v315 = vld [vmem:[%s307 + $0x58] sm:$0xff]
        %v316 = vld [vmem:[%s307 + $0x80] sm:$0xff]
        %v317 = vld [vmem:[%s307 + $0x88] sm:$0xff]
        %v318 = vld [vmem:[%s307 + $0x90] sm:$0xff]
        %v319 = vld [vmem:[%s307 + $0x98] sm:$0xff]
        %v320 = vld [vmem:[%s307 + $0xc0] sm:$0xff]
        %v321 = vld [vmem:[%s307 + $0xc8] sm:$0xff]
        %v322 = vld [vmem:[%s307 + $0xd0] sm:$0xff]
        %v323 = vld [vmem:[%s307 + $0xd8] sm:$0xff]
        %v324 = vld [vmem:[%s307 + $0x100] sm:$0xff]
        %v325 = vld [vmem:[%s307 + $0x108] sm:$0xff]
        %v326 = vld [vmem:[%s307 + $0x110] sm:$0xff]
        %v327 = vld [vmem:[%s307 + $0x118] sm:$0xff]
        %v328 = vld [vmem:[%s307 + $0x140] sm:$0xff]
        %v329 = vld [vmem:[%s307 + $0x148] sm:$0xff]
        %v330 = vld [vmem:[%s307 + $0x150] sm:$0xff]
        %v331 = vld [vmem:[%s307 + $0x158] sm:$0xff]
        %v332 = vld [vmem:[%s307 + $0x180] sm:$0x1]
        %v333 = vld [vmem:[%s307 + $0x188] sm:$0x1]
        %v334 = vld [vmem:[%s307 + $0x190] sm:$0x1]
        %v335 = vld [vmem:[%s307 + $0x198] sm:$0x1]
        %v336 = vld [vmem:[%s263] sm:$0xff]
        %v337 = vld [vmem:[%s263 + $0x8] sm:$0xff]
        %v338 = vld [vmem:[%s263 + $0x10] sm:$0xff]
        %v339 = vld [vmem:[%s263 + $0x18] sm:$0xff]
        %v340 = vld [vmem:[%s263 + $0x20] sm:$0xff]
        %v341 = vld [vmem:[%s263 + $0x28] sm:$0xff]
        %v342 = vld [vmem:[%s263 + $0x30] sm:$0xff]
        %v343 = vld [vmem:[%s263 + $0x38] sm:$0xff]
        %v344 = vld [vmem:[%s263 + $0x40] sm:$0xff]
        %v345 = vld [vmem:[%s263 + $0x48] sm:$0xff]
        %v346 = vld [vmem:[%s263 + $0x50] sm:$0xff]
        %v347 = vld [vmem:[%s263 + $0x58] sm:$0xff]
        %v348 = vld [vmem:[%s263 + $0x60] sm:$0x1]
        %v349 = vld [vmem:[%s263 + $0x68] sm:$0x1]
        %v350 = vld [vmem:[%s223] sm:$0xff]
        %v351 = vld [vmem:[%s223 + $0x8] sm:$0xff]
        %v352 = vld [vmem:[%s223 + $0x10] sm:$0xff]
        %v353 = vld [vmem:[%s223 + $0x18] sm:$0xff]
        %v354 = vld [vmem:[%s223 + $0x20] sm:$0xff]
        %v355 = vld [vmem:[%s223 + $0x28] sm:$0xff]
        %v356 = vld [vmem:[%s223 + $0x30] sm:$0xff]
        %v357 = vld [vmem:[%s223 + $0x38] sm:$0xff]
        %v358 = vld [vmem:[%s223 + $0x40] sm:$0xff]
        %v359 = vld [vmem:[%s223 + $0x48] sm:$0xff]
        %v360 = vld [vmem:[%s223 + $0x50] sm:$0xff]
        %v361 = vld [vmem:[%s223 + $0x58] sm:$0xff]
        %v362 = vld [vmem:[%s223 + $0x60] sm:$0xff]
        %v363 = vld [vmem:[%s223 + $0x68] sm:$0xff]
        %v364 = vld [vmem:[%s223 + $0x70] sm:$0xff]
        %v365 = vld [vmem:[%s223 + $0x78] sm:$0xff]
        %v366 = vld [vmem:[%s223 + $0x80] sm:$0xff]
        %v367 = vld [vmem:[%s223 + $0x88] sm:$0xff]
        %v368 = vld [vmem:[%s223 + $0x90] sm:$0xff]
        %v369 = vld [vmem:[%s223 + $0x98] sm:$0xff]
        %v370 = vld [vmem:[%s223 + $0xa0] sm:$0xff]
        %v371 = vld [vmem:[%s223 + $0xa8] sm:$0xff]
        %v372 = vld [vmem:[%s223 + $0xb0] sm:$0xff]
        %v373 = vld [vmem:[%s223 + $0xb8] sm:$0xff]
        %v374 = vld [vmem:[%s223 + $0xc0] sm:$0xff]
        %v375 = vld [vmem:[%s223 + $0xc8] sm:$0xff]
        %v376 = vld [vmem:[%s223 + $0xd0] sm:$0xff]
        %v377 = vld [vmem:[%s223 + $0xd8] sm:$0xff]
        %v378 = vld [vmem:[%s223 + $0xe0] sm:$0xff]
        %v379 = vld [vmem:[%s223 + $0xe8] sm:$0xff]
        %v380 = vld [vmem:[%s223 + $0xf0] sm:$0xff]
        %v381 = vld [vmem:[%s223 + $0xf8] sm:$0xff]
        %v382 = vld [vmem:[%s223 + $0x100] sm:$0xff]
        %v383 = vld [vmem:[%s223 + $0x108] sm:$0xff]
        %v384 = vld [vmem:[%s223 + $0x110] sm:$0xff]
        %v385 = vld [vmem:[%s223 + $0x118] sm:$0xff]
        %v386 = vld [vmem:[%s223 + $0x120] sm:$0xff]
        %v387 = vld [vmem:[%s223 + $0x128] sm:$0xff]
        %v388 = vld [vmem:[%s223 + $0x130] sm:$0xff]
        %v389 = vld [vmem:[%s223 + $0x138] sm:$0xff]
        %v390 = vld [vmem:[%s223 + $0x140] sm:$0xff]
        %v391 = vld [vmem:[%s223 + $0x148] sm:$0xff]
        %v392 = vld [vmem:[%s223 + $0x150] sm:$0xff]
        %v393 = vld [vmem:[%s223 + $0x158] sm:$0xff]
        %v394 = vld [vmem:[%s223 + $0x160] sm:$0xff]
        %v395 = vld [vmem:[%s223 + $0x168] sm:$0xff]
        %v396 = vld [vmem:[%s223 + $0x170] sm:$0xff]
        %v397 = vld [vmem:[%s223 + $0x178] sm:$0xff]
        %v398 = vld [vmem:[%s223 + $0x180] sm:$0xff]
        %v399 = vld [vmem:[%s223 + $0x188] sm:$0xff]
        %v400 = vld [vmem:[%s223 + $0x190] sm:$0xff]
        %v401 = vld [vmem:[%s223 + $0x198] sm:$0xff]
        %v402 = vld [vmem:[%s223 + $0x1a0] sm:$0xff]
        %v403 = vld [vmem:[%s223 + $0x1a8] sm:$0xff]
        %v404 = vld [vmem:[%s223 + $0x1b0] sm:$0xff]
        %v405 = vld [vmem:[%s223 + $0x1b8] sm:$0xff]
        %v406 = vld [vmem:[%s223 + $0x1c0] sm:$0xff]
        %v407 = vld [vmem:[%s223 + $0x1c8] sm:$0xff]
        %v408 = vld [vmem:[%s223 + $0x1d0] sm:$0xff]
        %v409 = vld [vmem:[%s223 + $0x1d8] sm:$0xff]
        %v410 = vld [vmem:[%s223 + $0x1e0] sm:$0xff]
        %v411 = vld [vmem:[%s223 + $0x1e8] sm:$0xff]
        %v412 = vld [vmem:[%s223 + $0x1f0] sm:$0xff]
        %v413 = vld [vmem:[%s223 + $0x1f8] sm:$0xff]
        %v414 = vld [vmem:[%s223 + $0x200] sm:$0xff]
        %v415 = vld [vmem:[%s223 + $0x208] sm:$0xff]
        %v416 = vld [vmem:[%s223 + $0x210] sm:$0xff]
        %v417 = vld [vmem:[%s223 + $0x218] sm:$0xff]
        %v418 = vld [vmem:[%s223 + $0x220] sm:$0xff]
        %v419 = vld [vmem:[%s223 + $0x228] sm:$0xff]
        %v420 = vld [vmem:[%s223 + $0x230] sm:$0xff]
        %v421 = vld [vmem:[%s223 + $0x238] sm:$0xff]
        %v422 = vld [vmem:[%s223 + $0x240] sm:$0xff]
        %v423 = vld [vmem:[%s223 + $0x248] sm:$0xff]
        %v424 = vld [vmem:[%s223 + $0x250] sm:$0xff]
        %v425 = vld [vmem:[%s223 + $0x258] sm:$0xff]
        %v426 = vld [vmem:[%s223 + $0x260] sm:$0xff]
        %v427 = vld [vmem:[%s223 + $0x268] sm:$0xff]
        %v428 = vld [vmem:[%s223 + $0x270] sm:$0xff]
        %v429 = vld [vmem:[%s223 + $0x278] sm:$0xff]
        %v430 = vld [vmem:[%s223 + $0x280] sm:$0xff]
        %v431 = vld [vmem:[%s223 + $0x288] sm:$0xff]
        %v432 = vld [vmem:[%s223 + $0x290] sm:$0xff]
        %v433 = vld [vmem:[%s223 + $0x298] sm:$0xff]
        %v434 = vld [vmem:[%s223 + $0x2a0] sm:$0xff]
        %v435 = vld [vmem:[%s223 + $0x2a8] sm:$0xff]
        %v436 = vld [vmem:[%s223 + $0x2b0] sm:$0xff]
        %v437 = vld [vmem:[%s223 + $0x2b8] sm:$0xff]
        %v438 = vld [vmem:[%s223 + $0x2c0] sm:$0xff]
        %v439 = vld [vmem:[%s223 + $0x2c8] sm:$0xff]
        %v440 = vld [vmem:[%s223 + $0x2d0] sm:$0xff]
        %v441 = vld [vmem:[%s223 + $0x2d8] sm:$0xff]
        %v442 = vld [vmem:[%s223 + $0x2e0] sm:$0xff]
        %v443 = vld [vmem:[%s223 + $0x2e8] sm:$0xff]
        %v444 = vld [vmem:[%s223 + $0x2f0] sm:$0xff]
        %v445 = vld [vmem:[%s223 + $0x2f8] sm:$0xff]
        %v446 = vld [vmem:[%s223 + $0x300] sm:$0xff]
        %v447 = vld [vmem:[%s223 + $0x308] sm:$0xff]
        %v448 = vld [vmem:[%s223 + $0x310] sm:$0xff]
        %v449 = vld [vmem:[%s223 + $0x318] sm:$0xff]
        %v450 = vld [vmem:[%s223 + $0x320] sm:$0xff]
        %v451 = vld [vmem:[%s223 + $0x328] sm:$0xff]
        %v452 = vld [vmem:[%s223 + $0x330] sm:$0xff]
        %v453 = vld [vmem:[%s223 + $0x338] sm:$0xff]
        %v454 = vld [vmem:[%s223 + $0x340] sm:$0xff]
        %v455 = vld [vmem:[%s223 + $0x348] sm:$0xff]
        %v456 = vld [vmem:[%s223 + $0x350] sm:$0xff]
        %v457 = vld [vmem:[%s223 + $0x358] sm:$0xff]
        %v458 = vld [vmem:[%s223 + $0x360] sm:$0xff]
        %v459 = vld [vmem:[%s223 + $0x368] sm:$0xff]
        %v460 = vld [vmem:[%s223 + $0x370] sm:$0xff]
        %v461 = vld [vmem:[%s223 + $0x378] sm:$0xff]
        %v462 = vld [vmem:[%s223 + $0x380] sm:$0xff]
        %v463 = vld [vmem:[%s223 + $0x388] sm:$0xff]
        %v464 = vld [vmem:[%s223 + $0x390] sm:$0xff]
        %v465 = vld [vmem:[%s223 + $0x398] sm:$0xff]
        %v466 = vld [vmem:[%s223 + $0x3a0] sm:$0xff]
        %v467 = vld [vmem:[%s223 + $0x3a8] sm:$0xff]
        %v468 = vld [vmem:[%s223 + $0x3b0] sm:$0xff]
        %v469 = vld [vmem:[%s223 + $0x3b8] sm:$0xff]
        %v470 = vld [vmem:[%s223 + $0x3c0] sm:$0xff]
        %v471 = vld [vmem:[%s223 + $0x3c8] sm:$0xff]
        %v472 = vld [vmem:[%s223 + $0x3d0] sm:$0xff]
        %v473 = vld [vmem:[%s223 + $0x3d8] sm:$0xff]
        %v474 = vld [vmem:[%s223 + $0x3e0] sm:$0xff]
        %v475 = vld [vmem:[%s223 + $0x3e8] sm:$0xff]
        %v476 = vld [vmem:[%s223 + $0x3f0] sm:$0xff]
        %v477 = vld [vmem:[%s223 + $0x3f8] sm:$0xff]
        %478 = vmatprep.subr.mxu0 %v351
        %479 = vmatpush1.xpose.msra.mxu0 %v350
        %480 = vmatprep.subr.mxu0 %v355
        %481 = vmatpush1.xpose.msra.mxu0 %v354
        %482 = vmatprep.subr.mxu0 %v359
        %483 = vmatpush1.xpose.msra.mxu0 %v358
        %484 = vmatprep.subr.mxu0 %v363
        %485 = vmatpush1.xpose.msra.mxu0 %v362
        %486 = vmatprep.subr.mxu0 %v367
        %487 = vmatpush1.xpose.msra.mxu0 %v366
        %488 = vmatprep.subr.mxu0 %v371
        %489 = vmatpush1.xpose.msra.mxu0 %v370
        %490 = vmatprep.subr.mxu0 %v375
        %491 = vmatpush1.xpose.msra.mxu0 %v374
        %492 = vmatprep.subr.mxu0 %v379
        %493 = vmatpush1.xpose.msra.mxu0 %v378
        %494 = vmatprep.subr.mxu0 %v383
        %495 = vmatpush1.xpose.msra.mxu0 %v382
        %496 = vmatprep.subr.mxu0 %v387
        %497 = vmatpush1.xpose.msra.mxu0 %v386
        %498 = vmatprep.subr.mxu0 %v391
        %499 = vmatpush1.xpose.msra.mxu0 %v390
        %500 = vmatprep.subr.mxu0 %v395
        %501 = vmatpush1.xpose.msra.mxu0 %v394
        %502 = vmatprep.subr.mxu0 %v399
        %503 = vmatpush1.xpose.msra.mxu0 %v398
        %504 = vmatprep.subr.mxu0 %v403
        %505 = vmatpush1.xpose.msra.mxu0 %v402
        %506 = vmatprep.subr.mxu0 %v407
        %507 = vmatpush1.xpose.msra.mxu0 %v406
        %508 = vmatprep.subr.mxu0 %v411
        %509 = vmatpush1.xpose.msra.mxu0 %v410
        %510 = vmatprep.subr.mxu0 %v415
        %511 = vmatpush1.xpose.msra.mxu0 %v414
        %512 = vmatprep.subr.mxu0 %v419
        %513 = vmatpush1.xpose.msra.mxu0 %v418
        %514 = vmatprep.subr.mxu0 %v423
        %515 = vmatpush1.xpose.msra.mxu0 %v422
        %516 = vmatprep.subr.mxu0 %v427
        %517 = vmatpush1.xpose.msra.mxu0 %v426
        %518 = vmatprep.subr.mxu0 %v431
        %519 = vmatpush1.xpose.msra.mxu0 %v430
        %520 = vmatprep.subr.mxu0 %v435
        %521 = vmatpush1.xpose.msra.mxu0 %v434
        %522 = vmatprep.subr.mxu0 %v439
        %523 = vmatpush1.xpose.msra.mxu0 %v438
        %524 = vmatprep.subr.mxu0 %v443
        %525 = vmatpush1.xpose.msra.mxu0 %v442
        %526 = vmatprep.subr.mxu0 %v447
        %527 = vmatpush1.xpose.msra.mxu0 %v446
        %528 = vmatprep.subr.mxu0 %v451
        %529 = vmatpush1.xpose.msra.mxu0 %v450
        %530 = vmatprep.subr.mxu0 %v455
        %531 = vmatpush1.xpose.msra.mxu0 %v454
        %532 = vmatprep.subr.mxu0 %v459
        %533 = vmatpush1.xpose.msra.mxu0 %v458
        %534 = vmatprep.subr.mxu0 %v463
        %535 = vmatpush1.xpose.msra.mxu0 %v462
        %536 = vmatprep.subr.mxu0 %v467
        %537 = vmatpush1.xpose.msra.mxu0 %v466
        %538 = vmatprep.subr.mxu0 %v471
        %539 = vmatpush1.xpose.msra.mxu0 %v470
        %540 = vmatprep.subr.mxu0 %v475
        %541 = vmatpush1.xpose.msra.mxu0 %v474
        %542 = vmatprep.mubr.f32.mxu0 %v309
        %543 = vmatmul.mubr.f32.gmra.mrb[0].mxu0 %v308
        %v544 = vpop.f32.mrb[0].mxu0
        %v545 = vadd.f32 0.0, %v544
        %v546 = vpop.f32.mrb[0].mxu0
        %v547 = vadd.f32 0.0, %v546
        %548 = vmatprep.mubr.f32.mxu0 %v313
        %549 = vmatmul.mubr.f32.gmra.mrb[0].mxu0 %v312
        %v550 = vpop.f32.mrb[0].mxu0
        %v551 = vadd.f32 0.0, %v550
        %v552 = vpop.f32.mrb[0].mxu0
        %v553 = vadd.f32 0.0, %v552
        %554 = vmatprep.mubr.f32.mxu0 %v317
        %555 = vmatmul.mubr.f32.gmra.mrb[0].mxu0 %v316
        %v556 = vpop.f32.mrb[0].mxu0
        %v557 = vadd.f32 0.0, %v556
        %v558 = vpop.f32.mrb[0].mxu0
        %v559 = vadd.f32 0.0, %v558
        %560 = vmatprep.mubr.f32.mxu0 %v321
        %561 = vmatmul.mubr.f32.gmra.mrb[0].mxu0 %v320
        %v562 = vpop.f32.mrb[0].mxu0
        %v563 = vadd.f32 0.0, %v562
        %v564 = vpop.f32.mrb[0].mxu0
        %v565 = vadd.f32 0.0, %v564
        %566 = vmatprep.mubr.f32.mxu0 %v325
        %567 = vmatmul.mubr.f32.gmra.mrb[0].mxu0 %v324
        %v568 = vpop.f32.mrb[0].mxu0
        %v569 = vadd.f32 0.0, %v568
        %v570 = vpop.f32.mrb[0].mxu0
        %v571 = vadd.f32 0.0, %v570
        %572 = vmatprep.mubr.f32.mxu0 %v329
        %573 = vmatmul.mubr.f32.gmra.mrb[0].mxu0 %v328
        %v574 = vpop.f32.mrb[0].mxu0
        %v575 = vadd.f32 0.0, %v574
        %v576 = vpop.f32.mrb[0].mxu0
        %v577 = vadd.f32 0.0, %v576
        %578 = vmatprep.mubr.f32.mxu0 %v333
        %579 = vmatmul.mubr.f32.gmra.mrb[0].mxu0 %v332
        %v580 = vpop.f32.mrb[0].mxu0
        %v581 = vadd.f32 0.0, %v580
        %v582 = vpop.f32.mrb[0].mxu0
        %v583 = vadd.f32 0.0, %v582
        %584 = vdwg.mxu0
        %585 = vmatprep.subr.mxu0 %v353
        %586 = vmatpush1.xpose.msra.mxu0 %v352
        %587 = vmatprep.subr.mxu0 %v357
        %588 = vmatpush1.xpose.msra.mxu0 %v356
        %589 = vmatprep.subr.mxu0 %v361
        %590 = vmatpush1.xpose.msra.mxu0 %v360
        %591 = vmatprep.subr.mxu0 %v365
        %592 = vmatpush1.xpose.msra.mxu0 %v364
        %593 = vmatprep.subr.mxu0 %v369
        %594 = vmatpush1.xpose.msra.mxu0 %v368
        %595 = vmatprep.subr.mxu0 %v373
        %596 = vmatpush1.xpose.msra.mxu0 %v372
        %597 = vmatprep.subr.mxu0 %v377
        %598 = vmatpush1.xpose.msra.mxu0 %v376
        %599 = vmatprep.subr.mxu0 %v381
        %600 = vmatpush1.xpose.msra.mxu0 %v380
        %601 = vmatprep.subr.mxu0 %v385
        %602 = vmatpush1.xpose.msra.mxu0 %v384
        %603 = vmatprep.subr.mxu0 %v389
        %604 = vmatpush1.xpose.msra.mxu0 %v388
        %605 = vmatprep.subr.mxu0 %v393
        %606 = vmatpush1.xpose.msra.mxu0 %v392
        %607 = vmatprep.subr.mxu0 %v397
        %608 = vmatpush1.xpose.msra.mxu0 %v396
        %609 = vmatprep.subr.mxu0 %v401
        %610 = vmatpush1.xpose.msra.mxu0 %v400
        %611 = vmatprep.subr.mxu0 %v405
        %612 = vmatpush1.xpose.msra.mxu0 %v404
        %613 = vmatprep.subr.mxu0 %v409
        %614 = vmatpush1.xpose.msra.mxu0 %v408
        %615 = vmatprep.subr.mxu0 %v413
        %616 = vmatpush1.xpose.msra.mxu0 %v412
        %617 = vmatprep.subr.mxu0 %v417
        %618 = vmatpush1.xpose.msra.mxu0 %v416
        %619 = vmatprep.subr.mxu0 %v421
        %620 = vmatpush1.xpose.msra.mxu0 %v420
        %621 = vmatprep.subr.mxu0 %v425
        %622 = vmatpush1.xpose.msra.mxu0 %v424
        %623 = vmatprep.subr.mxu0 %v429
        %624 = vmatpush1.xpose.msra.mxu0 %v428
        %625 = vmatprep.subr.mxu0 %v433
        %626 = vmatpush1.xpose.msra.mxu0 %v432
        %627 = vmatprep.subr.mxu0 %v437
        %628 = vmatpush1.xpose.msra.mxu0 %v436
        %629 = vmatprep.subr.mxu0 %v441
        %630 = vmatpush1.xpose.msra.mxu0 %v440
        %631 = vmatprep.subr.mxu0 %v445
        %632 = vmatpush1.xpose.msra.mxu0 %v444
        %633 = vmatprep.subr.mxu0 %v449
        %634 = vmatpush1.xpose.msra.mxu0 %v448
        %635 = vmatprep.subr.mxu0 %v453
        %636 = vmatpush1.xpose.msra.mxu0 %v452
        %637 = vmatprep.subr.mxu0 %v457
        %638 = vmatpush1.xpose.msra.mxu0 %v456
        %639 = vmatprep.subr.mxu0 %v461
        %640 = vmatpush1.xpose.msra.mxu0 %v460
        %641 = vmatprep.subr.mxu0 %v465
        %642 = vmatpush1.xpose.msra.mxu0 %v464
        %643 = vmatprep.subr.mxu0 %v469
        %644 = vmatpush1.xpose.msra.mxu0 %v468
        %645 = vmatprep.subr.mxu0 %v473
        %646 = vmatpush1.xpose.msra.mxu0 %v472
        %647 = vmatprep.subr.mxu0 %v477
        %648 = vmatpush1.xpose.msra.mxu0 %v476
        %649 = vmatprep.mubr.f32.mxu0 %v311
        %650 = vmatmul.mubr.f32.gmra.mrb[0].mxu0 %v310
        %v651 = vpop.f32.mrb[0].mxu0
        %v652 = vadd.f32 %v545, %v651
        %v653 = vpop.f32.mrb[0].mxu0
        %v654 = vadd.f32 %v547, %v653
        %655 = vmatprep.mubr.f32.mxu0 %v315
        %656 = vmatmul.mubr.f32.gmra.mrb[0].mxu0 %v314
        %v657 = vpop.f32.mrb[0].mxu0
        %v658 = vadd.f32 %v551, %v657
        %v659 = vpop.f32.mrb[0].mxu0
        %v660 = vadd.f32 %v553, %v659
        %661 = vmatprep.mubr.f32.mxu0 %v319
        %662 = vmatmul.mubr.f32.gmra.mrb[0].mxu0 %v318
        %v663 = vpop.f32.mrb[0].mxu0
        %v664 = vadd.f32 %v557, %v663
        %v665 = vpop.f32.mrb[0].mxu0
        %v666 = vadd.f32 %v559, %v665
        %667 = vmatprep.mubr.f32.mxu0 %v323
        %668 = vmatmul.mubr.f32.gmra.mrb[0].mxu0 %v322
        %v669 = vpop.f32.mrb[0].mxu0
        %v670 = vadd.f32 %v563, %v669
        %v671 = vpop.f32.mrb[0].mxu0
        %v672 = vadd.f32 %v565, %v671
        %673 = vmatprep.mubr.f32.mxu0 %v327
        %674 = vmatmul.mubr.f32.gmra.mrb[0].mxu0 %v326
        %v675 = vpop.f32.mrb[0].mxu0
        %v676 = vadd.f32 %v569, %v675
        %v677 = vpop.f32.mrb[0].mxu0
        %v678 = vadd.f32 %v571, %v677
        %679 = vmatprep.mubr.f32.mxu0 %v331
        %680 = vmatmul.mubr.f32.gmra.mrb[0].mxu0 %v330
        %v681 = vpop.f32.mrb[0].mxu0
        %v682 = vadd.f32 %v575, %v681
        %v683 = vpop.f32.mrb[0].mxu0
        %v684 = vadd.f32 %v577, %v683
        %685 = vmatprep.mubr.f32.mxu0 %v335
        %686 = vmatmul.mubr.f32.gmra.mrb[0].mxu0 %v334
        %v687 = vpop.f32.mrb[0].mxu0
        %v688 = vadd.f32 %v581, %v687
        %v689 = vpop.f32.mrb[0].mxu0
        %v690 = vadd.f32 %v583, %v689
        %691 = vdwg.mxu0
        %v692 = vadd.f32 %v336, %v652
        %v693 = vadd.f32 %v337, %v654
        %v694 = vadd.f32 %v338, %v658
        %v695 = vadd.f32 %v339, %v660
        %v696 = vadd.f32 %v340, %v664
        %v697 = vadd.f32 %v341, %v666
        %v698 = vadd.f32 %v342, %v670
        %v699 = vadd.f32 %v343, %v672
        %v700 = vadd.f32 %v344, %v676
        %v701 = vadd.f32 %v345, %v678
        %v702 = vadd.f32 %v346, %v682
        %v703 = vadd.f32 %v347, %v684
        %v704 = vadd.f32 %v348, %v688
        %v705 = vadd.f32 %v349, %v690
        %706 = vst [vmem:[%s263] sm:$0xff] %v692
        %707 = vst [vmem:[%s263 + $0x8] sm:$0xff] %v693
        %708 = vst [vmem:[%s263 + $0x10] sm:$0xff] %v694
        %709 = vst [vmem:[%s263 + $0x18] sm:$0xff] %v695
        %710 = vst [vmem:[%s263 + $0x20] sm:$0xff] %v696
        %711 = vst [vmem:[%s263 + $0x28] sm:$0xff] %v697
        %712 = vst [vmem:[%s263 + $0x30] sm:$0xff] %v698
        %713 = vst [vmem:[%s263 + $0x38] sm:$0xff] %v699
        %714 = vst [vmem:[%s263 + $0x40] sm:$0xff] %v700
        %715 = vst [vmem:[%s263 + $0x48] sm:$0xff] %v701
        %716 = vst [vmem:[%s263 + $0x50] sm:$0xff] %v702
        %717 = vst [vmem:[%s263 + $0x58] sm:$0xff] %v703
        %718 = vst [vmem:[%s263 + $0x60] sm:$0x1] %v704
        %719 = vst [vmem:[%s263 + $0x68] sm:$0x1] %v705
        %s720 = sand.u32 %s129, 1
        %s721 = sand.u32 %s129, 1
        %s722 = smul.addr %s721, 112
        %s723 = scalar_lea.vmem [#allocation6], %s722
        // Predicated region
        $region45: #{tpu_custom_call.1} parent=31 // pred_check
          %p724 = pneg %p139
        $region46: #{tpu_custom_call.1} parent=31 // pred_check_branch
          %726 = sbr.rel (%p724) target = $region48
        $region47: #{tpu_custom_call.1} parent=31 // pred_region
          %s727 = smul.u32 2, %s26
          %s728 = smul.addr %s25, 28
          %s729 = sadd.s32 %s727, %s728
          %s730 = smul.addr %s729, 8
          %s731 = scalar_lea.vmem %s3, %s730
          // Predicated region
          $region49: #{tpu_custom_call.1} parent=47 // pred_check
            _
          $region50: #{tpu_custom_call.1} parent=47 // pred_check_branch
            %733 = sbr.rel (0) target = $region52
          $region51: #{tpu_custom_call.1} parent=47 // pred_region
            // Predicated region
            $region53: #{tpu_custom_call.1} parent=51 // pred_check
              _
            $region54: #{tpu_custom_call.1} parent=51 // pred_check_branch
              %735 = sbr.rel (0) target = $region56
            $region55: #{tpu_custom_call.1} parent=51 // pred_region
              loop: start=0, step=1, limit=1
              $region57: #{tpu_custom_call.1} parent=55 // loop_pre_header
                _
              $region58: #{tpu_custom_call.1} parent=55 // loop_header
                %s737 = sphi 0, %s741
                %p738 = scmp.ge.s32.totalorder %s737, 1
                %s742 = sphi %s723, %s723
                %s743 = sphi %s731, %s731
              $region59: #{tpu_custom_call.1} parent=55 // loop_header_branch
                %740 = sbr.rel (%p738) target = $region63
              $region60: #{tpu_custom_call.1} parent=55 // loop_body
                %v744 = vld [vmem:[%s742] sm:$0xff]
                %745 = vst [vmem:[%s743] sm:$0xff] %v744
                %v746 = vld [vmem:[%s742 + $0x8] sm:$0xff]
                %747 = vst [vmem:[%s743 + $0x8] sm:$0xff] %v746
                %v748 = vld [vmem:[%s742 + $0x10] sm:$0xff]
                %749 = vst [vmem:[%s743 + $0x20] sm:$0xff] %v748
                %v750 = vld [vmem:[%s742 + $0x18] sm:$0xff]
                %751 = vst [vmem:[%s743 + $0x28] sm:$0xff] %v750
                %v752 = vld [vmem:[%s742 + $0x20] sm:$0xff]
                %753 = vst [vmem:[%s743 + $0x40] sm:$0xff] %v752
                %v754 = vld [vmem:[%s742 + $0x28] sm:$0xff]
                %755 = vst [vmem:[%s743 + $0x48] sm:$0xff] %v754
                %v756 = vld [vmem:[%s742 + $0x30] sm:$0xff]
                %757 = vst [vmem:[%s743 + $0x60] sm:$0xff] %v756
                %v758 = vld [vmem:[%s742 + $0x38] sm:$0xff]
                %759 = vst [vmem:[%s743 + $0x68] sm:$0xff] %v758
                %v760 = vld [vmem:[%s742 + $0x40] sm:$0xff]
                %761 = vst [vmem:[%s743 + $0x80] sm:$0xff] %v760
                %v762 = vld [vmem:[%s742 + $0x48] sm:$0xff]
                %763 = vst [vmem:[%s743 + $0x88] sm:$0xff] %v762
                %v764 = vld [vmem:[%s742 + $0x50] sm:$0xff]
                %765 = vst [vmem:[%s743 + $0xa0] sm:$0xff] %v764
                %v766 = vld [vmem:[%s742 + $0x58] sm:$0xff]
                %767 = vst [vmem:[%s743 + $0xa8] sm:$0xff] %v766
                %v768 = vld [vmem:[%s742 + $0x60] sm:$0xff]
                %769 = vst [vmem:[%s743 + $0xc0] sm:$0xff] %v768
                %v770 = vld [vmem:[%s742 + $0x68] sm:$0xff]
                %771 = vst [vmem:[%s743 + $0xc8] sm:$0xff] %v770
              $region61: #{tpu_custom_call.1} parent=55 // loop_footer
                %s741 = sadd.s32 1, %s737
              $region62: #{tpu_custom_call.1} parent=55 // loop_footer_branch
                %736 = sbr.rel target = $region58
              $region63: #{tpu_custom_call.1} parent=55 // loop_exit
                _
            $region56: #{tpu_custom_call.1} parent=51 // pred_fallthru
              _
            // Predicated region
            $region64: #{tpu_custom_call.1} parent=51 // pred_check
              _
            $region65: #{tpu_custom_call.1} parent=51 // pred_check_branch
              %773 = sbr.rel target = $region67
            $region66: #{tpu_custom_call.1} parent=51 // pred_region
              _
            $region67: #{tpu_custom_call.1} parent=51 // pred_fallthru
              _
          $region52: #{tpu_custom_call.1} parent=47 // pred_fallthru
            _
          %774 = vnop
        $region48: #{tpu_custom_call.1} parent=31 // pred_fallthru
          _
      $region32: #{tpu_custom_call.1} parent=5 // pred_fallthru
        _
      %p775 = scmp.le.s32.totalorder 2, %s15
      // Predicated region
      $region68: #{tpu_custom_call.1} parent=5 // pred_check
        %p776 = pneg %p775
      $region69: #{tpu_custom_call.1} parent=5 // pred_check_branch
        %778 = sbr.rel (%p776) target = $region71
      $region70: #{tpu_custom_call.1} parent=5 // pred_region
        %s779 = ssub.s32 %s15, 2
        // Predicated region
        $region72: #{tpu_custom_call.1} parent=70 // pred_check
          %p780 = pneg %p145
        $region73: #{tpu_custom_call.1} parent=70 // pred_check_branch
          %782 = sbr.rel (%p780) target = $region75
        $region74: #{tpu_custom_call.1} parent=70 // pred_region
          %s783 = sand.u32 %s130, 1
          %s784 = sand.u32 %s130, 1
          %s785 = smul.addr %s784, 112
          %s786 = scalar_lea.vmem [#allocation6], %s785
        $region75: #{tpu_custom_call.1} parent=70 // pred_fallthru
          _
      $region71: #{tpu_custom_call.1} parent=5 // pred_fallthru
        _
    $region6: #{tpu_custom_call.1} parent=1 // loop_footer
      %s19 = sadd.s32 1, %s15
    $region7: #{tpu_custom_call.1} parent=1 // loop_footer_branch
      %14 = sbr.rel target = $region3
    $region8: #{tpu_custom_call.1} parent=1 // loop_exit
      _
    %787 = vsyncpa [#allocation3], 1
    %s788 = scalar_lea.sflag [#allocation3], 1
    %789 = vsyncpa %s788, 1
    %790 = vsyncpa [#allocation5], 1
    %s791 = scalar_lea.sflag [#allocation5], 1
    %792 = vsyncpa %s791, 1

</llo_original>
